<compile_context>
chip_gen: v7x
topology: tpu7x:2x2x1
jax: 0.10.0
libtpu: 0.0.40
codegen_flags: <defaults>
</compile_context>

<pallas_src>
import jax
import jax.numpy as jnp
from jax.experimental import pallas as pl
from jax.experimental.pallas import tpu as pltpu


HIDDEN = 64                      # per-head hidden width (fused hidden = 128)
_FUSED_H = 2 * HIDDEN
_MAX_TB = 4096                   # double-buffered lane-padded blocks ~12.6 MiB


def _critic_kernel(state_ref, action_ref, w1s_ref, w1a_ref, w2_ref, w3_ref,
                   b_ref, q_ref):
    s = state_ref[...].astype(jnp.float32)
    a = action_ref[...].astype(jnp.float32)

    # Layer 1: split matmul -> no [state, action] concat, no unaligned
    # sublane slice of the fused weight.
    h = jnp.dot(s, w1s_ref[...], preferred_element_type=jnp.float32)
    h = h + jnp.dot(a, w1a_ref[...], preferred_element_type=jnp.float32)
    h = jnp.maximum(h + b_ref[0:1, :], 0.0)                    # ReLU

    # Layer 2: fused block-diagonal [128, 128] weight (both heads, one dot).
    h = jnp.dot(h, w2_ref[...], preferred_element_type=jnp.float32)
    h = jnp.maximum(h + b_ref[1:2, :], 0.0)                    # ReLU

    # Layer 3: [128, 2] -> column 0 is q1, column 1 is q2.
    q = jnp.dot(h, w3_ref[...], preferred_element_type=jnp.float32)
    q_ref[...] = q + b_ref[2:3, 0:2]


# ------------------------------ tiling helpers --------------------------------

def _round_up(x, m):
    return ((x + m - 1) // m) * m


def _cdiv(a, b):
    return -(-a // b)


def _num_tensorcores():
    """Best-effort detection of multi-TensorCore parts (v7x / megacore)."""
    try:
        kind = jax.devices()[0].device_kind.lower()
    except Exception:
        return 1
    if "v7" in kind or "7x" in kind:
        return 2
    if "v4" in kind or "v5p" in kind:
        return 2
    return 1


def _choose_batch_tile(batch):
    """Batch tile: multiple of 8 sublanes, as big as the VMEM budget allows,
    but split so multi-core parts get >= 2 grid steps to shard across."""
    b8 = _round_up(batch, 8)
    n_tc = _num_tensorcores()
    if n_tc > 1 and b8 > 8:
        tb = _round_up(_cdiv(b8, n_tc), 8)
    else:
        tb = b8
    return min(tb, _MAX_TB)


def _vmem_budget_bytes(tb, state_dim, action_dim):
    """VMEM bytes with (8,128) padding; streamed blocks are double-buffered."""
    def padded(r, c):
        return _round_up(r, 8) * _round_up(c, 128) * 4
    streamed = 2 * (padded(tb, state_dim) + padded(tb, action_dim)
                    + padded(tb, 2))
    weights = 2 * (padded(state_dim, _FUSED_H) + padded(action_dim, _FUSED_H)
                   + padded(_FUSED_H, _FUSED_H) + padded(_FUSED_H, 2)
                   + padded(3, _FUSED_H))
    return streamed + weights


# --------------------------------- forward ------------------------------------

@jax.jit
def critic_forward(state, action, packed_params):
    """Returns (q1, q2), each [batch, 1] float32 (matches the PyTorch module)."""
    w1s, w1a, w2, w3, b = packed_params
    batch, state_dim = state.shape
    action_dim = action.shape[1]
    in_dim = state_dim + action_dim

    tb = _choose_batch_tile(batch)
    grid = (_cdiv(batch, tb),)

    budget = _vmem_budget_bytes(tb, state_dim, action_dim)
    vmem_limit = int(min(max(budget * 5 // 4, 16 * 2**20), 48 * 2**20))

    weight_elems = w1s.size + w1a.size + w2.size + w3.size + b.size
    cost = pl.CostEstimate(
        flops=2 * batch * (in_dim * _FUSED_H + _FUSED_H * _FUSED_H
                           + _FUSED_H * 2),
        transcendentals=0,
        bytes_accessed=4 * (batch * (in_dim + 2) + int(weight_elems)),
    )

    q = pl.pallas_call(
        _critic_kernel,
        grid=grid,
        in_specs=[
            pl.BlockSpec((tb, state_dim), lambda i: (i, 0)),
            pl.BlockSpec((tb, action_dim), lambda i: (i, 0)),
            pl.BlockSpec((state_dim, _FUSED_H), lambda i: (0, 0)),
            pl.BlockSpec((action_dim, _FUSED_H), lambda i: (0, 0)),
            pl.BlockSpec((_FUSED_H, _FUSED_H), lambda i: (0, 0)),
            pl.BlockSpec((_FUSED_H, 2), lambda i: (0, 0)),
            pl.BlockSpec((3, _FUSED_H), lambda i: (0, 0)),
        ],
        out_specs=pl.BlockSpec((tb, 2), lambda i: (i, 0)),
        out_shape=jax.ShapeDtypeStruct((batch, 2), jnp.float32),
        compiler_params=pltpu.CompilerParams(
            dimension_semantics=("parallel",),
            vmem_limit_bytes=vmem_limit),
        cost_estimate=cost,
    )(state, action, w1s, w1a, w2, w3, b)

    # NOTE: rows are independent; any ragged-block garbage is never written to
    # the (batch, 2) output, so no slicing/padding is needed here.
    return q[:, 0:1], q[:, 1:2]


# ----------------------------- parameter handling -----------------------------

def _xavier_uniform(key, fan_in, fan_out, gain=1.0):
    # torch.nn.init.xavier_uniform_ (gain=1): U(-a, a), a = gain*sqrt(6/(fi+fo)).
    bound = gain * jnp.sqrt(6.0 / (fan_in + fan_out))
    # Stored [in_features, out_features] (transpose of PyTorch; symmetric dist).
    return jax.random.uniform(key, (fan_in, fan_out), jnp.float32,
                              minval=-bound, maxval=bound)


def init_critic_params(key, state_dim, action_dim, hidden=HIDDEN):
    in_dim = state_dim + action_dim
    keys = jax.random.split(key, 6)

    def head(k1, k2, k3):
        return (_xavier_uniform(k1, in_dim, hidden),
                jnp.zeros((1, hidden), jnp.float32),
                _xavier_uniform(k2, hidden, hidden),
                jnp.zeros((1, hidden), jnp.float32),
                _xavier_uniform(k3, hidden, 1),
                jnp.zeros((1, 1), jnp.float32))

    return head(keys[0], keys[1], keys[2]) + head(keys[3], keys[4], keys[5])


def pack_critic_params(per_head_params, state_dim, hidden=HIDDEN):
    """One-time packing of the two heads into fused 128-wide layers."""
    (w11, b11, w12, b12, w13, b13,
     w21, b21, w22, b22, w23, b23) = per_head_params
    h = hidden

    w1 = jnp.concatenate([w11, w21], axis=1)                   # [in_dim, 2h]
    w1s = w1[:state_dim, :]                                    # [S, 2h]
    w1a = w1[state_dim:, :]                                    # [A, 2h]

    w2 = jnp.zeros((2 * h, 2 * h), jnp.float32)                # block-diag
    w2 = w2.at[:h, :h].set(w12).at[h:, h:].set(w22)

    w3 = jnp.zeros((2 * h, 2), jnp.float32)                    # [2h, 2]
    w3 = w3.at[:h, 0:1].set(w13).at[h:, 1:2].set(w23)

    b = jnp.zeros((3, 2 * h), jnp.float32)
    b = b.at[0, :h].set(b11[0]).at[0, h:].set(b21[0])
    b = b.at[1, :h].set(b12[0]).at[1, h:].set(b22[0])
    b = b.at[2, 0].set(b13[0, 0]).at[2, 1].set(b23[0, 0])
    return w1s, w1a, w2, w3, b


# --------------------------------- reference ----------------------------------

def _reference_forward(state, action, per_head_params):
    sa = jnp.concatenate([state, action], axis=-1).astype(jnp.float32)
    (w11, b11, w12, b12, w13, b13,
     w21, b21, w22, b22, w23, b23) = per_head_params

    def mlp(w1, b1, w2, b2, w3, b3):
        h = jnp.maximum(sa @ w1 + b1, 0.0)
        h = jnp.maximum(h @ w2 + b2, 0.0)
        return h @ w3 + b3

    return (mlp(w11, b11, w12, b12, w13, b13),
            mlp(w21, b21, w22, b22, w23, b23))


if __name__ == "__main__":
    key = jax.random.PRNGKey(0)
    k_state, k_action, k_params = jax.random.split(key, 3)

    batch = 8
    state_dim = 8
    action_dim = 4

    state = jax.random.normal(k_state, (batch, state_dim), jnp.float32)
    action = jax.random.normal(k_action, (batch, action_dim), jnp.float32)

    per_head = init_critic_params(k_params, state_dim, action_dim)
    packed = jax.tree_util.tree_map(
        jax.block_until_ready, pack_critic_params(per_head, state_dim))

    q1, q2 = critic_forward(state, action, packed)
    jax.block_until_ready((q1, q2))

    q1_ref, q2_ref = _reference_forward(state, action, per_head)
    assert q1.shape == (batch, 1) and q2.shape == (batch, 1)
    assert jnp.allclose(q1, q1_ref, atol=1e-4, rtol=1e-4)
    assert jnp.allclose(q2, q2_ref, atol=1e-4, rtol=1e-4)

    print("KERNEL_OK")
</pallas_src>

<mosaic_0001>
module attributes {stable_mosaic.version = 11 : i64} {
  func.func @_critic_kernel(%arg0: i32, %arg1: memref<8x8xf32, #tpu.memory_space<vmem>>, %arg2: memref<8x4xf32, #tpu.memory_space<vmem>>, %arg3: memref<8x128xf32, #tpu.memory_space<vmem>>, %arg4: memref<4x128xf32, #tpu.memory_space<vmem>>, %arg5: memref<128x128xf32, #tpu.memory_space<vmem>>, %arg6: memref<128x2xf32, #tpu.memory_space<vmem>>, %arg7: memref<3x128xf32, #tpu.memory_space<vmem>>, %arg8: memref<8x2xf32, #tpu.memory_space<vmem>>) attributes {dimension_semantics = [#tpu.dimension_semantics<parallel>], iteration_bounds = array<i64: 1>, scalar_prefetch = 0 : i64, scratch_operands = 0 : i64, tpu.core_type = #tpu.core_type<tc>, window_params = [{transform_indices = @transform_0, window_bounds = array<i64: 8, 8>}, {transform_indices = @transform_1, window_bounds = array<i64: 8, 4>}, {pipeline_mode = #tpu.pipeline_mode<synchronous>, transform_indices = @transform_2, window_bounds = array<i64: 8, 128>}, {pipeline_mode = #tpu.pipeline_mode<synchronous>, transform_indices = @transform_3, window_bounds = array<i64: 4, 128>}, {pipeline_mode = #tpu.pipeline_mode<synchronous>, transform_indices = @transform_4, window_bounds = array<i64: 128, 128>}, {pipeline_mode = #tpu.pipeline_mode<synchronous>, transform_indices = @transform_5, window_bounds = array<i64: 128, 2>}, {pipeline_mode = #tpu.pipeline_mode<synchronous>, transform_indices = @transform_6, window_bounds = array<i64: 3, 128>}, {transform_indices = @transform_7, window_bounds = array<i64: 8, 2>}]} {
    %c0 = arith.constant 0 : index
    %c0_0 = arith.constant 0 : index
    %0 = vector.load %arg1[%c0, %c0_0] : memref<8x8xf32, #tpu.memory_space<vmem>>, vector<8x8xf32>
    %c0_1 = arith.constant 0 : index
    %c0_2 = arith.constant 0 : index
    %1 = vector.load %arg2[%c0_1, %c0_2] : memref<8x4xf32, #tpu.memory_space<vmem>>, vector<8x4xf32>
    %c0_3 = arith.constant 0 : index
    %c0_4 = arith.constant 0 : index
    %2 = vector.load %arg3[%c0_3, %c0_4] : memref<8x128xf32, #tpu.memory_space<vmem>>, vector<8x128xf32>
    %cst = arith.constant dense<0.000000e+00> : vector<8x128xf32>
    %3 = tpu.matmul %0, %2, %cst {dimension_numbers = #tpu.dot_dimension_numbers<[1], [0], [0], [1], [0, 0, 1, 1], [], []>} : vector<8x8xf32>, vector<8x128xf32>, vector<8x128xf32> -> vector<8x128xf32>
    %c0_5 = arith.constant 0 : index
    %c0_6 = arith.constant 0 : index
    %4 = vector.load %arg4[%c0_5, %c0_6] : memref<4x128xf32, #tpu.memory_space<vmem>>, vector<4x128xf32>
    %cst_7 = arith.constant dense<0.000000e+00> : vector<8x128xf32>
    %5 = tpu.matmul %1, %4, %cst_7 {dimension_numbers = #tpu.dot_dimension_numbers<[1], [0], [0], [1], [0, 0, 1, 1], [], []>} : vector<8x4xf32>, vector<4x128xf32>, vector<8x128xf32> -> vector<8x128xf32>
    %6 = arith.addf %3, %5 : vector<8x128xf32>
    %c0_8 = arith.constant 0 : index
    %c0_9 = arith.constant 0 : index
    %7 = vector.load %arg7[%c0_8, %c0_9] : memref<3x128xf32, #tpu.memory_space<vmem>>, vector<1x128xf32>
    %8 = vector.broadcast %7 : vector<1x128xf32> to vector<8x128xf32>
    %9 = arith.addf %6, %8 : vector<8x128xf32>
    %cst_10 = arith.constant 0.000000e+00 : f32
    %10 = vector.broadcast %cst_10 : f32 to vector<8x128xf32>
    %11 = arith.maximumf %9, %10 : vector<8x128xf32>
    %c0_11 = arith.constant 0 : index
    %c0_12 = arith.constant 0 : index
    %12 = vector.load %arg5[%c0_11, %c0_12] : memref<128x128xf32, #tpu.memory_space<vmem>>, vector<128x128xf32>
    %cst_13 = arith.constant dense<0.000000e+00> : vector<8x128xf32>
    %13 = tpu.matmul %11, %12, %cst_13 {dimension_numbers = #tpu.dot_dimension_numbers<[1], [0], [0], [1], [0, 0, 1, 1], [], []>} : vector<8x128xf32>, vector<128x128xf32>, vector<8x128xf32> -> vector<8x128xf32>
    %c1 = arith.constant 1 : index
    %c0_14 = arith.constant 0 : index
    %14 = vector.load %arg7[%c1, %c0_14] : memref<3x128xf32, #tpu.memory_space<vmem>>, vector<1x128xf32>
    %15 = vector.broadcast %14 : vector<1x128xf32> to vector<8x128xf32>
    %16 = arith.addf %13, %15 : vector<8x128xf32>
    %cst_15 = arith.constant 0.000000e+00 : f32
    %17 = vector.broadcast %cst_15 : f32 to vector<8x128xf32>
    %18 = arith.maximumf %16, %17 : vector<8x128xf32>
    %c0_16 = arith.constant 0 : index
    %c0_17 = arith.constant 0 : index
    %19 = vector.load %arg6[%c0_16, %c0_17] : memref<128x2xf32, #tpu.memory_space<vmem>>, vector<128x2xf32>
    %cst_18 = arith.constant dense<0.000000e+00> : vector<8x2xf32>
    %20 = tpu.matmul %18, %19, %cst_18 {dimension_numbers = #tpu.dot_dimension_numbers<[1], [0], [0], [1], [0, 0, 1, 1], [], []>} : vector<8x128xf32>, vector<128x2xf32>, vector<8x2xf32> -> vector<8x2xf32>
    %c2 = arith.constant 2 : index
    %c0_19 = arith.constant 0 : index
    %21 = vector.load %arg7[%c2, %c0_19] : memref<3x128xf32, #tpu.memory_space<vmem>>, vector<1x2xf32>
    %22 = vector.broadcast %21 : vector<1x2xf32> to vector<8x2xf32>
    %23 = arith.addf %20, %22 : vector<8x2xf32>
    %c0_20 = arith.constant 0 : index
    %c0_21 = arith.constant 0 : index
    %24 = vector.load %arg8[%c0_20, %c0_21] : memref<8x2xf32, #tpu.memory_space<vmem>>, vector<8x2xf32>
    tpu.vector_store %arg8[%c0_20, %c0_21], %23 {strides = array<i32>} : memref<8x2xf32, #tpu.memory_space<vmem>>, vector<8x2xf32>,
    return
  }
  func.func @transform_0(%arg0: i32) -> (i32, i32) {
    %c0_i32 = arith.constant 0 : i32
    %c0_i32_0 = arith.constant 0 : i32
    return %arg0, %c0_i32 : i32, i32
  }
  func.func @transform_1(%arg0: i32) -> (i32, i32) {
    %c0_i32 = arith.constant 0 : i32
    %c0_i32_0 = arith.constant 0 : i32
    return %arg0, %c0_i32 : i32, i32
  }
  func.func @transform_2(%arg0: i32) -> (i32, i32) {
    %c0_i32 = arith.constant 0 : i32
    %c0_i32_0 = arith.constant 0 : i32
    %c0_i32_1 = arith.constant 0 : i32
    return %c0_i32, %c0_i32_0 : i32, i32
  }
  func.func @transform_3(%arg0: i32) -> (i32, i32) {
    %c0_i32 = arith.constant 0 : i32
    %c0_i32_0 = arith.constant 0 : i32
    %c0_i32_1 = arith.constant 0 : i32
    return %c0_i32, %c0_i32_0 : i32, i32
  }
  func.func @transform_4(%arg0: i32) -> (i32, i32) {
    %c0_i32 = arith.constant 0 : i32
    %c0_i32_0 = arith.constant 0 : i32
    %c0_i32_1 = arith.constant 0 : i32
    return %c0_i32, %c0_i32_0 : i32, i32
  }
  func.func @transform_5(%arg0: i32) -> (i32, i32) {
    %c0_i32 = arith.constant 0 : i32
    %c0_i32_0 = arith.constant 0 : i32
    %c0_i32_1 = arith.constant 0 : i32
    return %c0_i32, %c0_i32_0 : i32, i32
  }
  func.func @transform_6(%arg0: i32) -> (i32, i32) {
    %c0_i32 = arith.constant 0 : i32
    %c0_i32_0 = arith.constant 0 : i32
    %c0_i32_1 = arith.constant 0 : i32
    return %c0_i32, %c0_i32_0 : i32, i32
  }
  func.func @transform_7(%arg0: i32) -> (i32, i32) {
    %c0_i32 = arith.constant 0 : i32
    %c0_i32_0 = arith.constant 0 : i32
    return %arg0, %c0_i32 : i32, i32
  }
}

</mosaic_0001>

<llo_original>
// kernel: critic_forward.1
$region0: #{critic_forward.1}
  #allocation0 [shape = 'u32[]', space=smem, size = 0x4, offset = 0x4, fixed_abs, tag = 'smem constant byte address 0x4 - core index']
  #allocation1 [shape = 'u32[144,128]{1,0:T(1,128)}', space=vmem, size = 0x12000, scoped, tag = 'internal scratch']
  %s0 = inlined_call_operand.vmem [shape: f32[8,8], index: 0, kind: input, shape index: {}]
  %s1 = inlined_call_operand.vmem [shape: f32[8,4], index: 1, kind: input, shape index: {}]
  %s2 = inlined_call_operand.vmem [shape: f32[8,128], index: 2, kind: input, shape index: {}]
  %s3 = inlined_call_operand.vmem [shape: f32[4,128], index: 3, kind: input, shape index: {}]
  %s4 = inlined_call_operand.vmem [shape: f32[128,128], index: 4, kind: input, shape index: {}]
  %s5 = inlined_call_operand.vmem [shape: f32[128,2], index: 5, kind: input, shape index: {}]
  %s6 = inlined_call_operand.vmem [shape: f32[3,128], index: 6, kind: input, shape index: {}]
  %s7 = inlined_call_operand.vmem [shape: f32[8,2], index: 7, kind: output, shape index: {}]
  %s8 = sld [smem:[#allocation0]]
  $region38: #{critic_forward.1} parent=0
    _
  %s10 = ssub.s32 1, %s8
  %s11 = scalar_select 0, %s10, %s8
  // Predicated region
  $region2: #{critic_forward.1} parent=0 // pred_check
    _
  $region3: #{critic_forward.1} parent=0 // pred_check_branch
    %13 = sbr.rel (0) target = $region5
  $region4: #{critic_forward.1} parent=0 // pred_region
    _
  $region5: #{critic_forward.1} parent=0 // pred_fallthru
    _
  // Predicated region
  $region6: #{critic_forward.1} parent=0 // pred_check
    _
  $region7: #{critic_forward.1} parent=0 // pred_check_branch
    %15 = sbr.rel (0) target = $region9
  $region8: #{critic_forward.1} parent=0 // pred_region
    _
  $region9: #{critic_forward.1} parent=0 // pred_fallthru
    _
  // Predicated region
  $region10: #{critic_forward.1} parent=0 // pred_check
    _
  $region11: #{critic_forward.1} parent=0 // pred_check_branch
    %17 = sbr.rel (0) target = $region13
  $region12: #{critic_forward.1} parent=0 // pred_region
    _
  $region13: #{critic_forward.1} parent=0 // pred_fallthru
    _
  // Predicated region
  $region14: #{critic_forward.1} parent=0 // pred_check
    _
  $region15: #{critic_forward.1} parent=0 // pred_check_branch
    %19 = sbr.rel (0) target = $region17
  $region16: #{critic_forward.1} parent=0 // pred_region
    _
  $region17: #{critic_forward.1} parent=0 // pred_fallthru
    _
  // Predicated region
  $region18: #{critic_forward.1} parent=0 // pred_check
    _
  $region19: #{critic_forward.1} parent=0 // pred_check_branch
    %21 = sbr.rel (0) target = $region21
  $region20: #{critic_forward.1} parent=0 // pred_region
    _
  $region21: #{critic_forward.1} parent=0 // pred_fallthru
    _
  // Predicated region
  $region22: #{critic_forward.1} parent=0 // pred_check
    _
  $region23: #{critic_forward.1} parent=0 // pred_check_branch
    %23 = sbr.rel (0) target = $region25
  $region24: #{critic_forward.1} parent=0 // pred_region
    _
  $region25: #{critic_forward.1} parent=0 // pred_fallthru
    _
  // Predicated region
  $region26: #{critic_forward.1} parent=0 // pred_check
    _
  $region27: #{critic_forward.1} parent=0 // pred_check_branch
    %25 = sbr.rel (0) target = $region29
  $region28: #{critic_forward.1} parent=0 // pred_region
    _
  $region29: #{critic_forward.1} parent=0 // pred_fallthru
    _
  %v26 = vld [vmem:[%s0] sm:$0xff]
  %v27 = vld [vmem:[%s1] sm:$0xff]
  %v28 = vld [vmem:[%s2] sm:$0xff]
  %v29 = vld [vmem:[%s3] sm:$0xf]
  %vm30 = vcmask 31744
  %v32 = vsel %vm30, %v27, 0
  %vm34 = vcmask 1043456
  %v36 = vsel %vm34, %v29, 0
  %38 = vmatprep.subr.mxu0 0.0
  %39 = vmatpush1.msra.mxu0 %v36
  %40 = vmatprep.subr.mxu0 0.0
  %41 = vmatpush1.msra.mxu0 0.0
  %42 = vmatprep.subr.mxu0 0.0
  %43 = vmatpush1.msra.mxu0 0.0
  %44 = vmatprep.subr.mxu0 0.0
  %45 = vmatpush1.msra.mxu0 0.0
  %46 = vmatprep.subr.mxu0 0.0
  %47 = vmatpush1.msra.mxu0 0.0
  %48 = vmatprep.subr.mxu0 0.0
  %49 = vmatpush1.msra.mxu0 0.0
  %50 = vmatprep.subr.mxu0 0.0
  %51 = vmatpush1.msra.mxu0 0.0
  %52 = vmatprep.subr.mxu0 0.0
  %53 = vmatpush1.msra.mxu0 0.0
  %54 = vmatprep.subr.mxu0 0.0
  %55 = vmatpush1.msra.mxu0 0.0
  %56 = vmatprep.subr.mxu0 0.0
  %57 = vmatpush1.msra.mxu0 0.0
  %58 = vmatprep.subr.mxu0 0.0
  %59 = vmatpush1.msra.mxu0 0.0
  %60 = vmatprep.subr.mxu0 0.0
  %61 = vmatpush1.msra.mxu0 0.0
  %62 = vmatprep.subr.mxu0 0.0
  %63 = vmatpush1.msra.mxu0 0.0
  %64 = vmatprep.subr.mxu0 0.0
  %65 = vmatpush1.msra.mxu0 0.0
  %66 = vmatprep.subr.mxu0 0.0
  %67 = vmatpush1.msra.mxu0 0.0
  %68 = vmatprep.subr.mxu0 0.0
  %69 = vmatpush1.msra.mxu0 0.0
  %70 = vmatprep.subr.mxu0 0.0
  %71 = vmatpush1.msra.mxu0 0.0
  %72 = vmatprep.subr.mxu0 0.0
  %73 = vmatpush1.msra.mxu0 0.0
  %74 = vmatprep.subr.mxu0 0.0
  %75 = vmatpush1.msra.mxu0 0.0
  %76 = vmatprep.subr.mxu0 0.0
  %77 = vmatpush1.msra.mxu0 0.0
  %78 = vmatprep.subr.mxu0 0.0
  %79 = vmatpush1.msra.mxu0 0.0
  %80 = vmatprep.subr.mxu0 0.0
  %81 = vmatpush1.msra.mxu0 0.0
  %82 = vmatprep.subr.mxu0 0.0
  %83 = vmatpush1.msra.mxu0 0.0
  %84 = vmatprep.subr.mxu0 0.0
  %85 = vmatpush1.msra.mxu0 0.0
  %86 = vmatprep.subr.mxu0 0.0
  %87 = vmatpush1.msra.mxu0 0.0
  %88 = vmatprep.subr.mxu0 0.0
  %89 = vmatpush1.msra.mxu0 0.0
  %90 = vmatprep.subr.mxu0 0.0
  %91 = vmatpush1.msra.mxu0 0.0
  %92 = vmatprep.subr.mxu0 0.0
  %93 = vmatpush1.msra.mxu0 0.0
  %94 = vmatprep.subr.mxu0 0.0
  %95 = vmatpush1.msra.mxu0 0.0
  %96 = vmatprep.subr.mxu0 0.0
  %97 = vmatpush1.msra.mxu0 0.0
  %98 = vmatprep.subr.mxu0 0.0
  %99 = vmatpush1.msra.mxu0 0.0
  %100 = vmatprep.subr.mxu0 0.0
  %101 = vmatpush1.msra.mxu0 0.0
  %102 = vmatprep.mubr.f32.mxu0 0.0
  %103 = vmatmul.mubr.f32.gmra.mrb[0].mxu0 %v32
  %v104 = vpop.f32.mrb[0].mxu0
  %v105 = vadd.f32 0.0, %v104
  %v106 = vpop.f32.mrb[0].mxu0
  %107 = vdwg.mxu0
  %vm108 = vcmask 64512
  %v110 = vsel %vm108, %v26, 0
  %112 = vmatprep.subr.mxu0 0.0
  %113 = vmatpush1.msra.mxu0 %v28
  %114 = vmatprep.subr.mxu0 0.0
  %115 = vmatpush1.msra.mxu0 0.0
  %116 = vmatprep.subr.mxu0 0.0
  %117 = vmatpush1.msra.mxu0 0.0
  %118 = vmatprep.subr.mxu0 0.0
  %119 = vmatpush1.msra.mxu0 0.0
  %120 = vmatprep.subr.mxu0 0.0
  %121 = vmatpush1.msra.mxu0 0.0
  %122 = vmatprep.subr.mxu0 0.0
  %123 = vmatpush1.msra.mxu0 0.0
  %124 = vmatprep.subr.mxu0 0.0
  %125 = vmatpush1.msra.mxu0 0.0
  %126 = vmatprep.subr.mxu0 0.0
  %127 = vmatpush1.msra.mxu0 0.0
  %128 = vmatprep.subr.mxu0 0.0
  %129 = vmatpush1.msra.mxu0 0.0
  %130 = vmatprep.subr.mxu0 0.0
  %131 = vmatpush1.msra.mxu0 0.0
  %132 = vmatprep.subr.mxu0 0.0
  %133 = vmatpush1.msra.mxu0 0.0
  %134 = vmatprep.subr.mxu0 0.0
  %135 = vmatpush1.msra.mxu0 0.0
  %136 = vmatprep.subr.mxu0 0.0
  %137 = vmatpush1.msra.mxu0 0.0
  %138 = vmatprep.subr.mxu0 0.0
  %139 = vmatpush1.msra.mxu0 0.0
  %140 = vmatprep.subr.mxu0 0.0
  %141 = vmatpush1.msra.mxu0 0.0
  %142 = vmatprep.subr.mxu0 0.0
  %143 = vmatpush1.msra.mxu0 0.0
  %144 = vmatprep.subr.mxu0 0.0
  %145 = vmatpush1.msra.mxu0 0.0
  %146 = vmatprep.subr.mxu0 0.0
  %147 = vmatpush1.msra.mxu0 0.0
  %148 = vmatprep.subr.mxu0 0.0
  %149 = vmatpush1.msra.mxu0 0.0
  %150 = vmatprep.subr.mxu0 0.0
  %151 = vmatpush1.msra.mxu0 0.0
  %152 = vmatprep.subr.mxu0 0.0
  %153 = vmatpush1.msra.mxu0 0.0
  %154 = vmatprep.subr.mxu0 0.0
  %155 = vmatpush1.msra.mxu0 0.0
  %156 = vmatprep.subr.mxu0 0.0
  %157 = vmatpush1.msra.mxu0 0.0
  %158 = vmatprep.subr.mxu0 0.0
  %159 = vmatpush1.msra.mxu0 0.0
  %160 = vmatprep.subr.mxu0 0.0
  %161 = vmatpush1.msra.mxu0 0.0
  %162 = vmatprep.subr.mxu0 0.0
  %163 = vmatpush1.msra.mxu0 0.0
  %164 = vmatprep.subr.mxu0 0.0
  %165 = vmatpush1.msra.mxu0 0.0
  %166 = vmatprep.subr.mxu0 0.0
  %167 = vmatpush1.msra.mxu0 0.0
  %168 = vmatprep.subr.mxu0 0.0
  %169 = vmatpush1.msra.mxu0 0.0
  %170 = vmatprep.subr.mxu0 0.0
  %171 = vmatpush1.msra.mxu0 0.0
  %172 = vmatprep.subr.mxu0 0.0
  %173 = vmatpush1.msra.mxu0 0.0
  %174 = vmatprep.subr.mxu0 0.0
  %175 = vmatpush1.msra.mxu0 0.0
  %176 = vmatprep.mubr.f32.mxu0 0.0
  %177 = vmatmul.mubr.f32.gmra.mrb[0].mxu0 %v110
  %v178 = vpop.f32.mrb[0].mxu0
  %v179 = vadd.f32 %v105, %v178
  %v180 = vpop.f32.mrb[0].mxu0
  %181 = vdwg.mxu0
  %v182 = vld [vmem:[%s6] sm:$0x1]
  %v183 = vlaneseq
  %v184 = vshrl.u32 %v183, 7
  %v185 = vsub.s32 0, %v184
  %v186 = vrot.slane %v182, %v185
  %v187 = vadd.f32 %v179, %v186
  %v188 = vmax.f32 %v187, 0.0
  %v189 = vld [vmem:[%s4] sm:$0xff]
  %v190 = vld [vmem:[%s4 + $0x8] sm:$0xff]
  %v191 = vld [vmem:[%s4 + $0x10] sm:$0xff]
  %v192 = vld [vmem:[%s4 + $0x18] sm:$0xff]
  %v193 = vld [vmem:[%s4 + $0x20] sm:$0xff]
  %v194 = vld [vmem:[%s4 + $0x28] sm:$0xff]
  %v195 = vld [vmem:[%s4 + $0x30] sm:$0xff]
  %v196 = vld [vmem:[%s4 + $0x38] sm:$0xff]
  %v197 = vld [vmem:[%s4 + $0x40] sm:$0xff]
  %v198 = vld [vmem:[%s4 + $0x48] sm:$0xff]
  %v199 = vld [vmem:[%s4 + $0x50] sm:$0xff]
  %v200 = vld [vmem:[%s4 + $0x58] sm:$0xff]
  %v201 = vld [vmem:[%s4 + $0x60] sm:$0xff]
  %v202 = vld [vmem:[%s4 + $0x68] sm:$0xff]
  %v203 = vld [vmem:[%s4 + $0x70] sm:$0xff]
  %v204 = vld [vmem:[%s4 + $0x78] sm:$0xff]
  %v205 = vld [vmem:[%s6 + $0x1] sm:$0x1]
  %v206 = vlaneseq
  %v207 = vshrl.u32 %v206, 7
  %v208 = vsub.s32 0, %v207
  %v209 = vrot.slane %v205, %v208
  %210 = vmatprep.subr.mxu0 0.0
  %211 = vmatpush1.msra.mxu0 %v189
  %212 = vmatprep.subr.mxu0 0.0
  %213 = vmatpush1.msra.mxu0 %v190
  %214 = vmatprep.subr.mxu0 0.0
  %215 = vmatpush1.msra.mxu0 %v191
  %216 = vmatprep.subr.mxu0 0.0
  %217 = vmatpush1.msra.mxu0 %v192
  %218 = vmatprep.subr.mxu0 0.0
  %219 = vmatpush1.msra.mxu0 %v193
  %220 = vmatprep.subr.mxu0 0.0
  %221 = vmatpush1.msra.mxu0 %v194
  %222 = vmatprep.subr.mxu0 0.0
  %223 = vmatpush1.msra.mxu0 %v195
  %224 = vmatprep.subr.mxu0 0.0
  %225 = vmatpush1.msra.mxu0 %v196
  %226 = vmatprep.subr.mxu0 0.0
  %227 = vmatpush1.msra.mxu0 %v197
  %228 = vmatprep.subr.mxu0 0.0
  %229 = vmatpush1.msra.mxu0 %v198
  %230 = vmatprep.subr.mxu0 0.0
  %231 = vmatpush1.msra.mxu0 %v199
  %232 = vmatprep.subr.mxu0 0.0
  %233 = vmatpush1.msra.mxu0 %v200
  %234 = vmatprep.subr.mxu0 0.0
  %235 = vmatpush1.msra.mxu0 %v201
  %236 = vmatprep.subr.mxu0 0.0
  %237 = vmatpush1.msra.mxu0 %v202
  %238 = vmatprep.subr.mxu0 0.0
  %239 = vmatpush1.msra.mxu0 %v203
  %240 = vmatprep.subr.mxu0 0.0
  %241 = vmatpush1.msra.mxu0 %v204
  %242 = vmatprep.subr.mxu0 0.0
  %243 = vmatpush1.msra.mxu0 0.0
  %244 = vmatprep.subr.mxu0 0.0
  %245 = vmatpush1.msra.mxu0 0.0
  %246 = vmatprep.subr.mxu0 0.0
  %247 = vmatpush1.msra.mxu0 0.0
  %248 = vmatprep.subr.mxu0 0.0
  %249 = vmatpush1.msra.mxu0 0.0
  %250 = vmatprep.subr.mxu0 0.0
  %251 = vmatpush1.msra.mxu0 0.0
  %252 = vmatprep.subr.mxu0 0.0
  %253 = vmatpush1.msra.mxu0 0.0
  %254 = vmatprep.subr.mxu0 0.0
  %255 = vmatpush1.msra.mxu0 0.0
  %256 = vmatprep.subr.mxu0 0.0
  %257 = vmatpush1.msra.mxu0 0.0
  %258 = vmatprep.subr.mxu0 0.0
  %259 = vmatpush1.msra.mxu0 0.0
  %260 = vmatprep.subr.mxu0 0.0
  %261 = vmatpush1.msra.mxu0 0.0
  %262 = vmatprep.subr.mxu0 0.0
  %263 = vmatpush1.msra.mxu0 0.0
  %264 = vmatprep.subr.mxu0 0.0
  %265 = vmatpush1.msra.mxu0 0.0
  %266 = vmatprep.subr.mxu0 0.0
  %267 = vmatpush1.msra.mxu0 0.0
  %268 = vmatprep.subr.mxu0 0.0
  %269 = vmatpush1.msra.mxu0 0.0
  %270 = vmatprep.subr.mxu0 0.0
  %271 = vmatpush1.msra.mxu0 0.0
  %272 = vmatprep.subr.mxu0 0.0
  %273 = vmatpush1.msra.mxu0 0.0
  %274 = vmatprep.mubr.f32.mxu0 0.0
  %275 = vmatmul.mubr.f32.gmra.mrb[0].mxu0 %v188
  %v276 = vpop.f32.mrb[0].mxu0
  %v277 = vadd.f32 %v209, %v276
  %v278 = vpop.f32.mrb[0].mxu0
  %279 = vdwg.mxu0
  %v280 = vmax.f32 %v277, 0.0
  %v281 = vld [vmem:[%s5] sm:$0xff]
  %v282 = vld [vmem:[%s5 + $0x8] sm:$0xff]
  %v283 = vld [vmem:[%s5 + $0x10] sm:$0xff]
  %v284 = vld [vmem:[%s5 + $0x18] sm:$0xff]
  %v285 = vld [vmem:[%s5 + $0x20] sm:$0xff]
  %v286 = vld [vmem:[%s5 + $0x28] sm:$0xff]
  %v287 = vld [vmem:[%s5 + $0x30] sm:$0xff]
  %v288 = vld [vmem:[%s5 + $0x38] sm:$0xff]
  %v289 = vld [vmem:[%s5 + $0x40] sm:$0xff]
  %v290 = vld [vmem:[%s5 + $0x48] sm:$0xff]
  %v291 = vld [vmem:[%s5 + $0x50] sm:$0xff]
  %v292 = vld [vmem:[%s5 + $0x58] sm:$0xff]
  %v293 = vld [vmem:[%s5 + $0x60] sm:$0xff]
  %v294 = vld [vmem:[%s5 + $0x68] sm:$0xff]
  %v295 = vld [vmem:[%s5 + $0x70] sm:$0xff]
  %v296 = vld [vmem:[%s5 + $0x78] sm:$0xff]
  %v297 = vld [vmem:[%s6 + $0x2] sm:$0x1]
  %v298 = vlaneseq
  %v299 = vshrl.u32 %v298, 7
  %v300 = vsub.s32 0, %v299
  %v301 = vrot.slane %v297, %v300
  %302 = vmatprep.subr.mxu0 0.0
  %303 = vmatpush1.msra.mxu0 %v281
  %304 = vmatprep.subr.mxu0 0.0
  %305 = vmatpush1.msra.mxu0 %v282
  %306 = vmatprep.subr.mxu0 0.0
  %307 = vmatpush1.msra.mxu0 %v283
  %308 = vmatprep.subr.mxu0 0.0
  %309 = vmatpush1.msra.mxu0 %v284
  %310 = vmatprep.subr.mxu0 0.0
  %311 = vmatpush1.msra.mxu0 %v285
  %312 = vmatprep.subr.mxu0 0.0
  %313 = vmatpush1.msra.mxu0 %v286
  %314 = vmatprep.subr.mxu0 0.0
  %315 = vmatpush1.msra.mxu0 %v287
  %316 = vmatprep.subr.mxu0 0.0
  %317 = vmatpush1.msra.mxu0 %v288
  %318 = vmatprep.subr.mxu0 0.0
  %319 = vmatpush1.msra.mxu0 %v289
  %320 = vmatprep.subr.mxu0 0.0
  %321 = vmatpush1.msra.mxu0 %v290
  %322 = vmatprep.subr.mxu0 0.0
  %323 = vmatpush1.msra.mxu0 %v291
  %324 = vmatprep.subr.mxu0 0.0
  %325 = vmatpush1.msra.mxu0 %v292
  %326 = vmatprep.subr.mxu0 0.0
  %327 = vmatpush1.msra.mxu0 %v293
  %328 = vmatprep.subr.mxu0 0.0
  %329 = vmatpush1.msra.mxu0 %v294
  %330 = vmatprep.subr.mxu0 0.0
  %331 = vmatpush1.msra.mxu0 %v295
  %332 = vmatprep.subr.mxu0 0.0
  %333 = vmatpush1.msra.mxu0 %v296
  %334 = vmatprep.subr.mxu0 0.0
  %335 = vmatpush1.msra.mxu0 0.0
  %336 = vmatprep.subr.mxu0 0.0
  %337 = vmatpush1.msra.mxu0 0.0
  %338 = vmatprep.subr.mxu0 0.0
  %339 = vmatpush1.msra.mxu0 0.0
  %340 = vmatprep.subr.mxu0 0.0
  %341 = vmatpush1.msra.mxu0 0.0
  %342 = vmatprep.subr.mxu0 0.0
  %343 = vmatpush1.msra.mxu0 0.0
  %344 = vmatprep.subr.mxu0 0.0
  %345 = vmatpush1.msra.mxu0 0.0
  %346 = vmatprep.subr.mxu0 0.0
  %347 = vmatpush1.msra.mxu0 0.0
  %348 = vmatprep.subr.mxu0 0.0
  %349 = vmatpush1.msra.mxu0 0.0
  %350 = vmatprep.subr.mxu0 0.0
  %351 = vmatpush1.msra.mxu0 0.0
  %352 = vmatprep.subr.mxu0 0.0
  %353 = vmatpush1.msra.mxu0 0.0
  %354 = vmatprep.subr.mxu0 0.0
  %355 = vmatpush1.msra.mxu0 0.0
  %356 = vmatprep.subr.mxu0 0.0
  %357 = vmatpush1.msra.mxu0 0.0
  %358 = vmatprep.subr.mxu0 0.0
  %359 = vmatpush1.msra.mxu0 0.0
  %360 = vmatprep.subr.mxu0 0.0
  %361 = vmatpush1.msra.mxu0 0.0
  %362 = vmatprep.subr.mxu0 0.0
  %363 = vmatpush1.msra.mxu0 0.0
  %364 = vmatprep.subr.mxu0 0.0
  %365 = vmatpush1.msra.mxu0 0.0
  %366 = vmatprep.mubr.f32.mxu0 0.0
  %367 = vmatmul.mubr.f32.gmra.mrb[0].mxu0 %v280
  %v368 = vpop.f32.mrb[0].mxu0
  %v369 = vadd.f32 %v301, %v368
  %v370 = vpop.f32.mrb[0].mxu0
  %371 = vdwg.mxu0
  %vm372 = vcmask 15360
  %373 = vst.msk [vmem:[%s7] sm:$0xff] %vm372, %v369
  // Predicated region
  $region30: #{critic_forward.1} parent=0 // pred_check
    _
  $region31: #{critic_forward.1} parent=0 // pred_check_branch
    %375 = sbr.rel (0) target = $region33
  $region32: #{critic_forward.1} parent=0 // pred_region
    _
  $region33: #{critic_forward.1} parent=0 // pred_fallthru
    _
  // Predicated region
  $region34: #{critic_forward.1} parent=0 // pred_check
    _
  $region35: #{critic_forward.1} parent=0 // pred_check_branch
    %377 = sbr.rel (0) target = $region37
  $region36: #{critic_forward.1} parent=0 // pred_region
    _
  $region37: #{critic_forward.1} parent=0 // pred_fallthru
    _

</llo_original>
